<compile_context>
chip_gen: v5e
topology: v5e:2x2
jax: 0.10.0
libtpu: 0.0.40
codegen_flags: <defaults>
</compile_context>

<pallas_src>
import functools

import jax
import jax.numpy as jnp
from jax.experimental import pallas as pl
from jax.experimental.pallas import tpu as pltpu


# --------------------------------------------------------------------------
# small utilities
# --------------------------------------------------------------------------
def _round_up(x, m):
    return (x + m - 1) // m * m


def _largest_divisor_tile(n, target, unit=128):
    """Largest multiple of `unit` that divides n and is <= min(target, n).
    Fallback: n itself (tiny / odd dims become a single tile)."""
    t = (min(target, n) // unit) * unit
    while t >= unit:
        if n % t == 0:
            return t
        t -= unit
    return n


def _device_kind():
    try:
        return jax.devices()[0].device_kind.lower()
    except Exception:
        return ""


def _vmem_capacity_bytes():
    """Physical VMEM per TensorCore; queried, with a device_kind fallback."""
    try:
        info = pltpu.get_tpu_info()
        cap = getattr(info, "vmem_capacity_bytes", None)
        if cap:
            return int(cap)
    except Exception:
        pass
    kind = _device_kind()
    if "v7" in kind or "tpu7" in kind:
        return 64 << 20
    if any(g in kind for g in ("v2", "v3", "v4", "v5", "v6")):
        return 128 << 20
    return 64 << 20  # unknown chip: be conservative


def _vmem_estimate(tm, D, tile_h, gate_chunk, xb, wb, num_h_tiles):
    """VMEM bytes needed for one grid step, incl. compiler-managed temps."""
    est = 0
    est += 2 * tm * D * xb                    # x tile (double-buffered)
    est += 2 * tm * D * xb                    # out tile (double-buffered)
    est += 2 * (D * 2 * tile_h) * wb          # fused [W1^T|W3^T] tile, 2 bufs
    est += 2 * (tile_h * D) * wb              # W2^T tile, 2 bufs
    if num_h_tiles > 1:
        est += tm * D * 4                     # f32 accumulator scratch
    est += tm * D * 4                         # f32 per-tile partial
    est += tm * 2 * gate_chunk * 4            # f32 fused chunk
    est += tm * gate_chunk * (4 + wb)         # gated (f32) + low-precision cast
    return est


# --------------------------------------------------------------------------
# kernel
# --------------------------------------------------------------------------
def _ffn_kernel(x_ref, w13_ref, w2_ref, o_ref, *scratch,
                tile_h, gate_chunk, gate_in_bf16, num_h_tiles):
    # x_ref:   (TM, D)        token tile
    # w13_ref: (D, 2*TH)      gate-chunk interleaved [W1^T | W3^T] tile
    # w2_ref:  (TH, D)        W2^T tile
    # o_ref:   (TM, D)        output tile (written on the last hidden tile)
    # scratch: () or ((TM, D) f32 accumulator) when num_h_tiles > 1
    acc_ref = scratch[0] if scratch else None
    h = pl.program_id(1)
    x = x_ref[...]

    n_chunks = tile_h // gate_chunk
    part = None
    # Walk the hidden tile in lane-aligned sub-chunks so the live f32
    # intermediates stay small (no spill through the vld/vst slots).
    for c in range(n_chunks):
        lo = 2 * c * gate_chunk
        # One MXU pass computes both the W1 and W3 projections for this chunk.
        fused = jnp.dot(x, w13_ref[:, lo:lo + 2 * gate_chunk],
                        preferred_element_type=jnp.float32)
        h1 = fused[:, :gate_chunk]
        h3 = fused[:, gate_chunk:]
        if gate_in_bf16:
            # bf16 VPU/EUP path (v6e / v7x): halves vreg footprint of the gate.
            h1 = h1.astype(jnp.bfloat16)
            h3 = h3.astype(jnp.bfloat16)
        gated = h1 * jax.nn.sigmoid(h1) * h3          # silu(h1) * h3
        contrib = jnp.dot(gated.astype(w2_ref.dtype),
                          w2_ref[c * gate_chunk:(c + 1) * gate_chunk, :],
                          preferred_element_type=jnp.float32)
        part = contrib if part is None else part + contrib

    if num_h_tiles == 1:
        # Single hidden tile: no accumulator scratch, write output directly.
        o_ref[...] = part.astype(o_ref.dtype)
    else:
        last = num_h_tiles - 1

        @pl.when(h == 0)
        def _():
            acc_ref[...] = part

        @pl.when(jnp.logical_and(h > 0, h < last))
        def _():
            acc_ref[...] += part

        @pl.when(h == last)
        def _():
            # Fused finalize: skip the last accumulator store + extra pass.
            o_ref[...] = (acc_ref[...] + part).astype(o_ref.dtype)


# --------------------------------------------------------------------------
# one-time weight preparation (do this ONCE per weight set, not per call)
# --------------------------------------------------------------------------
def prepare_ffn_weights(w1, w2, w3, *, tile_h=None, gate_chunk=256, dtype=None):
    """Returns (w13, w2t, tile_h, gate_chunk).

    w13: (D, 2H) with consecutive 2*gate_chunk columns holding
         [W1^T chunk | W3^T chunk] so the kernel does one fused MXU pass per
         gate chunk and splits h1/h3 with static slices.
    w2t: (H, D) = W2^T.
    """
    H, D = w1.shape
    if dtype is None:
        dtype = w1.dtype

    if tile_h is None:
        kind = _device_kind()
        # v7x has half the VMEM: smaller hidden tiles leave room for a big tm.
        tile_h = 256 if ("v7" in kind or "tpu7" in kind) else 512

    tile_h = _largest_divisor_tile(H, max(tile_h, 128))
    gate_chunk = _largest_divisor_tile(tile_h, gate_chunk)

    nchunks = H // gate_chunk
    w1t = jnp.transpose(w1).reshape(D, nchunks, gate_chunk)
    w3t = jnp.transpose(w3).reshape(D, nchunks, gate_chunk)
    w13 = jnp.concatenate([w1t, w3t], axis=2).reshape(D, 2 * H).astype(dtype)
    w2t = jnp.transpose(w2).astype(dtype)
    return w13, w2t, tile_h, gate_chunk


# --------------------------------------------------------------------------
# wrapper
# --------------------------------------------------------------------------
def feed_forward(x, w13, w2t, tile_h, gate_chunk, *, tile_m=None):
    """x: (B, S, D); w13: (D, 2H) prepared; w2t: (H, D) prepared -> (B, S, D)."""
    B, S, D = x.shape
    H = w2t.shape[0]
    assert w13.shape == (D, 2 * H)
    assert H % tile_h == 0 and tile_h % gate_chunk == 0

    num_h_tiles = H // tile_h
    M = B * S
    x2 = x.reshape(M, D)
    xb = x2.dtype.itemsize
    wb = w13.dtype.itemsize

    kind = _device_kind()
    vmem_cap = _vmem_capacity_bytes()
    headroom = (12 << 20) if vmem_cap <= (64 << 20) else (16 << 20)
    budget = vmem_cap - headroom

    # Row alignment: bf16 packs 2 rows/sublane -> 16; f32 -> 8.
    align = 16 if xb < 4 else 8

    if tile_m is None:
        # Largest token tile (multiple of 128, <= 1024) whose working set fits
        # the per-chip VMEM budget: amortizes the per-m-tile weight stream
        # toward the MXU roofline.
        tile_m = 128
        for cand in range(1024, 127, -128):
            if _vmem_estimate(cand, D, tile_h, gate_chunk,
                              xb, wb, num_h_tiles) <= budget:
                tile_m = cand
                break

    tm = min(tile_m, _round_up(M, align))
    tm = max(align, (tm // align) * align)

    # v7x: 2 TensorCores per chip. If the whole batch fits one big m-tile,
    # split it so the "parallel" M axis is non-degenerate (only worth it once
    # the halves are still near the compute-bound token count).
    if ("v7" in kind or "tpu7" in kind) and tm >= 512 and _round_up(M, tm) == tm:
        half = _round_up((tm + 1) // 2, 128)
        if half < tm:
            tm = half

    Mp = _round_up(M, tm)
    if Mp != M:
        x2 = jnp.pad(x2, ((0, Mp - M), (0, 0)))

    grid = (Mp // tm, num_h_tiles)
    num_m_tiles = Mp // tm

    vmem_est = _vmem_estimate(tm, D, tile_h, gate_chunk, xb, wb, num_h_tiles)
    vmem_limit = int(min(max(vmem_est * 5 // 4 + (2 << 20), 32 << 20),
                         vmem_cap - headroom))

    # Advisory cost estimate so XLA can overlap this call with neighbors.
    flops = 6 * Mp * H * D
    transcendentals = Mp * H
    bytes_accessed = 2 * Mp * D * xb + num_m_tiles * 3 * H * D * wb
    cost = pl.CostEstimate(flops=int(flops),
                           transcendentals=int(transcendentals),
                           bytes_accessed=int(bytes_accessed))

    # bf16 gate math only where the chip has a bf16 VPU/EUP (not v5-class).
    is_pre_v6 = any(g in kind for g in ("v2", "v3", "v4", "v5"))
    gate_in_bf16 = bool(x.dtype == jnp.bfloat16 and kind and not is_pre_v6)

    kernel = functools.partial(_ffn_kernel,
                               tile_h=tile_h,
                               gate_chunk=gate_chunk,
                               gate_in_bf16=gate_in_bf16,
                               num_h_tiles=num_h_tiles)

    scratch_shapes = ([pltpu.VMEM((tm, D), jnp.float32)]
                      if num_h_tiles > 1 else [])

    out = pl.pallas_call(
        kernel,
        out_shape=jax.ShapeDtypeStruct((Mp, D), x.dtype),
        grid_spec=pltpu.PrefetchScalarGridSpec(
            num_scalar_prefetch=0,
            grid=grid,
            in_specs=[
                pl.BlockSpec((tm, D), lambda m, h: (m, 0)),            # x tile
                pl.BlockSpec((D, 2 * tile_h), lambda m, h: (0, h)),    # [W1^T|W3^T]
                pl.BlockSpec((tile_h, D), lambda m, h: (h, 0)),        # W2^T tile
            ],
            out_specs=pl.BlockSpec((tm, D), lambda m, h: (m, 0)),
            scratch_shapes=scratch_shapes,
        ),
        compiler_params=pltpu.CompilerParams(
            dimension_semantics=("parallel", "arbitrary"),
            vmem_limit_bytes=vmem_limit),
        cost_estimate=cost,
    )(x2, w13, w2t)

    return out[:M].reshape(B, S, D)


# --------------------------------------------------------------------------
# reference + test
# --------------------------------------------------------------------------
def _ref_feed_forward(x, w1, w2, w3):
    h1 = jnp.einsum("bsd,hd->bsh", x, w1)
    h3 = jnp.einsum("bsd,hd->bsh", x, w3)
    gated = jax.nn.silu(h1) * h3
    return jnp.einsum("bsh,dh->bsd", gated, w2)


if __name__ == "__main__":
    # Small shapes consistent with the module's hidden-dim formula:
    #   dim=128, multiple_of=128 -> hidden_dim = int(2*4*128/3) = 341
    #   hidden = 128 * ceil(341/128) = 384
    dim = 128
    multiple_of = 128
    hidden_dim = int(2 * (4 * dim) / 3)
    hidden = multiple_of * ((hidden_dim + multiple_of - 1) // multiple_of)  # 384

    batch, seq = 2, 8

    key = jax.random.PRNGKey(0)
    kx, k1, k2, k3 = jax.random.split(key, 4)
    x = jax.random.normal(kx, (batch, seq, dim), dtype=jnp.float32)
    # Deterministic synthetic weights (shapes match nn.Linear: (out, in)).
    w1 = jax.random.normal(k1, (hidden, dim), dtype=jnp.float32) * 0.02
    w2 = jax.random.normal(k2, (dim, hidden), dtype=jnp.float32) * 0.02
    w3 = jax.random.normal(k3, (hidden, dim), dtype=jnp.float32) * 0.02

    # --- f32 path (tight check) ---
    w13_f32, w2t_f32, th, gc = prepare_ffn_weights(w1, w2, w3)
    out = feed_forward(x, w13_f32, w2t_f32, th, gc)
    out = jax.block_until_ready(out)
    ref = _ref_feed_forward(x, w1, w2, w3)
    assert out.shape == (batch, seq, dim)
    assert jnp.allclose(out, ref, atol=1e-4, rtol=1e-4), "f32 mismatch vs reference"

    # --- bf16 path (recommended production precision; looser tolerance) ---
    xb = x.astype(jnp.bfloat16)
    w1b = w1.astype(jnp.bfloat16)
    w2b = w2.astype(jnp.bfloat16)
    w3b = w3.astype(jnp.bfloat16)
    w13_bf, w2t_bf, thb, gcb = prepare_ffn_weights(w1b, w2b, w3b)
    out_bf = feed_forward(xb, w13_bf, w2t_bf, thb, gcb)
    out_bf = jax.block_until_ready(out_bf)
    ref_bf = _ref_feed_forward(xb.astype(jnp.float32), w1b.astype(jnp.float32),
                               w2b.astype(jnp.float32), w3b.astype(jnp.float32))
    assert jnp.allclose(out_bf.astype(jnp.float32), ref_bf,
                        atol=3e-2, rtol=3e-2), "bf16 mismatch vs reference"

    print("KERNEL_OK")
</pallas_src>

<mosaic_0001>
module attributes {stable_mosaic.version = 11 : i64} {
  func.func @_ffn_kernel(%arg0: i32, %arg1: i32, %arg2: memref<16x128xf32, #tpu.memory_space<vmem>>, %arg3: memref<128x768xf32, #tpu.memory_space<vmem>>, %arg4: memref<384x128xf32, #tpu.memory_space<vmem>>, %arg5: memref<16x128xf32, #tpu.memory_space<vmem>>) attributes {dimension_semantics = [#tpu.dimension_semantics<parallel>, #tpu.dimension_semantics<arbitrary>], iteration_bounds = array<i64: 1, 1>, scalar_prefetch = 0 : i64, scratch_operands = 0 : i64, tpu.core_type = #tpu.core_type<tc>, window_params = [{transform_indices = @transform_0, window_bounds = array<i64: 16, 128>}, {transform_indices = @transform_1, window_bounds = array<i64: 128, 768>}, {transform_indices = @transform_2, window_bounds = array<i64: 384, 128>}, {transform_indices = @transform_3, window_bounds = array<i64: 16, 128>}]} {
    %c0 = arith.constant 0 : index
    %c0_0 = arith.constant 0 : index
    %0 = vector.load %arg2[%c0, %c0_0] : memref<16x128xf32, #tpu.memory_space<vmem>>, vector<16x128xf32>
    %c0_1 = arith.constant 0 : index
    %c0_2 = arith.constant 0 : index
    %1 = vector.load %arg3[%c0_1, %c0_2] : memref<128x768xf32, #tpu.memory_space<vmem>>, vector<128x256xf32>
    %cst = arith.constant dense<0.000000e+00> : vector<16x256xf32>
    %2 = tpu.matmul %0, %1, %cst {dimension_numbers = #tpu.dot_dimension_numbers<[1], [0], [0], [1], [0, 0, 1, 1], [], []>} : vector<16x128xf32>, vector<128x256xf32>, vector<16x256xf32> -> vector<16x256xf32>
    %3 = vector.extract_strided_slice %2 {offsets = [0, 0], sizes = [16, 128], strides = [1, 1]} : vector<16x256xf32> to vector<16x128xf32>
    %4 = vector.extract_strided_slice %2 {offsets = [0, 128], sizes = [16, 128], strides = [1, 1]} : vector<16x256xf32> to vector<16x128xf32>
    %5 = arith.negf %3 : vector<16x128xf32>
    %6 = math.exp %5 : vector<16x128xf32>
    %cst_3 = arith.constant 1.000000e+00 : f32
    %7 = vector.broadcast %cst_3 : f32 to vector<16x128xf32>
    %8 = arith.addf %7, %6 : vector<16x128xf32>
    %9 = arith.divf %7, %8 : vector<16x128xf32>
    %10 = arith.mulf %3, %9 : vector<16x128xf32>
    %11 = arith.mulf %10, %4 : vector<16x128xf32>
    %c0_4 = arith.constant 0 : index
    %c0_5 = arith.constant 0 : index
    %12 = vector.load %arg4[%c0_4, %c0_5] : memref<384x128xf32, #tpu.memory_space<vmem>>, vector<128x128xf32>
    %cst_6 = arith.constant dense<0.000000e+00> : vector<16x128xf32>
    %13 = tpu.matmul %11, %12, %cst_6 {dimension_numbers = #tpu.dot_dimension_numbers<[1], [0], [0], [1], [0, 0, 1, 1], [], []>} : vector<16x128xf32>, vector<128x128xf32>, vector<16x128xf32> -> vector<16x128xf32>
    %c0_7 = arith.constant 0 : index
    %c256 = arith.constant 256 : index
    %14 = vector.load %arg3[%c0_7, %c256] : memref<128x768xf32, #tpu.memory_space<vmem>>, vector<128x256xf32>
    %cst_8 = arith.constant dense<0.000000e+00> : vector<16x256xf32>
    %15 = tpu.matmul %0, %14, %cst_8 {dimension_numbers = #tpu.dot_dimension_numbers<[1], [0], [0], [1], [0, 0, 1, 1], [], []>} : vector<16x128xf32>, vector<128x256xf32>, vector<16x256xf32> -> vector<16x256xf32>
    %16 = vector.extract_strided_slice %15 {offsets = [0, 0], sizes = [16, 128], strides = [1, 1]} : vector<16x256xf32> to vector<16x128xf32>
    %17 = vector.extract_strided_slice %15 {offsets = [0, 128], sizes = [16, 128], strides = [1, 1]} : vector<16x256xf32> to vector<16x128xf32>
    %18 = arith.negf %16 : vector<16x128xf32>
    %19 = math.exp %18 : vector<16x128xf32>
    %cst_9 = arith.constant 1.000000e+00 : f32
    %20 = vector.broadcast %cst_9 : f32 to vector<16x128xf32>
    %21 = arith.addf %20, %19 : vector<16x128xf32>
    %22 = arith.divf %20, %21 : vector<16x128xf32>
    %23 = arith.mulf %16, %22 : vector<16x128xf32>
    %24 = arith.mulf %23, %17 : vector<16x128xf32>
    %c128 = arith.constant 128 : index
    %c0_10 = arith.constant 0 : index
    %25 = vector.load %arg4[%c128, %c0_10] : memref<384x128xf32, #tpu.memory_space<vmem>>, vector<128x128xf32>
    %cst_11 = arith.constant dense<0.000000e+00> : vector<16x128xf32>
    %26 = tpu.matmul %24, %25, %cst_11 {dimension_numbers = #tpu.dot_dimension_numbers<[1], [0], [0], [1], [0, 0, 1, 1], [], []>} : vector<16x128xf32>, vector<128x128xf32>, vector<16x128xf32> -> vector<16x128xf32>
    %27 = arith.addf %13, %26 : vector<16x128xf32>
    %c0_12 = arith.constant 0 : index
    %c512 = arith.constant 512 : index
    %28 = vector.load %arg3[%c0_12, %c512] : memref<128x768xf32, #tpu.memory_space<vmem>>, vector<128x256xf32>
    %cst_13 = arith.constant dense<0.000000e+00> : vector<16x256xf32>
    %29 = tpu.matmul %0, %28, %cst_13 {dimension_numbers = #tpu.dot_dimension_numbers<[1], [0], [0], [1], [0, 0, 1, 1], [], []>} : vector<16x128xf32>, vector<128x256xf32>, vector<16x256xf32> -> vector<16x256xf32>
    %30 = vector.extract_strided_slice %29 {offsets = [0, 0], sizes = [16, 128], strides = [1, 1]} : vector<16x256xf32> to vector<16x128xf32>
    %31 = vector.extract_strided_slice %29 {offsets = [0, 128], sizes = [16, 128], strides = [1, 1]} : vector<16x256xf32> to vector<16x128xf32>
    %32 = arith.negf %30 : vector<16x128xf32>
    %33 = math.exp %32 : vector<16x128xf32>
    %cst_14 = arith.constant 1.000000e+00 : f32
    %34 = vector.broadcast %cst_14 : f32 to vector<16x128xf32>
    %35 = arith.addf %34, %33 : vector<16x128xf32>
    %36 = arith.divf %34, %35 : vector<16x128xf32>
    %37 = arith.mulf %30, %36 : vector<16x128xf32>
    %38 = arith.mulf %37, %31 : vector<16x128xf32>
    %c256_15 = arith.constant 256 : index
    %c0_16 = arith.constant 0 : index
    %39 = vector.load %arg4[%c256_15, %c0_16] : memref<384x128xf32, #tpu.memory_space<vmem>>, vector<128x128xf32>
    %cst_17 = arith.constant dense<0.000000e+00> : vector<16x128xf32>
    %40 = tpu.matmul %38, %39, %cst_17 {dimension_numbers = #tpu.dot_dimension_numbers<[1], [0], [0], [1], [0, 0, 1, 1], [], []>} : vector<16x128xf32>, vector<128x128xf32>, vector<16x128xf32> -> vector<16x128xf32>
    %41 = arith.addf %27, %40 : vector<16x128xf32>
    %c0_18 = arith.constant 0 : index
    %c0_19 = arith.constant 0 : index
    %42 = vector.load %arg5[%c0_18, %c0_19] : memref<16x128xf32, #tpu.memory_space<vmem>>, vector<16x128xf32>
    tpu.vector_store %arg5[%c0_18, %c0_19], %41 {strides = array<i32>} : memref<16x128xf32, #tpu.memory_space<vmem>>, vector<16x128xf32>,
    return
  }
  func.func @transform_0(%arg0: i32, %arg1: i32) -> (i32, i32) {
    %c0_i32 = arith.constant 0 : i32
    %c0_i32_0 = arith.constant 0 : i32
    return %arg0, %c0_i32 : i32, i32
  }
  func.func @transform_1(%arg0: i32, %arg1: i32) -> (i32, i32) {
    %c0_i32 = arith.constant 0 : i32
    %c0_i32_0 = arith.constant 0 : i32
    return %c0_i32, %arg1 : i32, i32
  }
  func.func @transform_2(%arg0: i32, %arg1: i32) -> (i32, i32) {
    %c0_i32 = arith.constant 0 : i32
    %c0_i32_0 = arith.constant 0 : i32
    return %arg1, %c0_i32 : i32, i32
  }
  func.func @transform_3(%arg0: i32, %arg1: i32) -> (i32, i32) {
    %c0_i32 = arith.constant 0 : i32
    %c0_i32_0 = arith.constant 0 : i32
    return %arg0, %c0_i32 : i32, i32
  }
}

</mosaic_0001>

<llo_original>
// kernel: tpu_custom_call.1
$region0: #{tpu_custom_call.1}
  #allocation0 [shape = 'u32[]', space=smem, size = 0x4, offset = 0x4, fixed_abs, tag = 'smem constant byte address 0x4 - core index']
  #allocation1 [shape = 'u32[72,128]{1,0:T(1,128)}', space=vmem, size = 0x9000, scoped, tag = 'internal scratch']
  %s0 = inlined_call_operand.hbm [shape: f32[16,128], index: 0, kind: input, shape index: {}]
  %s1 = inlined_call_operand.hbm [shape: f32[128,768], index: 1, kind: input, shape index: {}]
  %s2 = inlined_call_operand.hbm [shape: f32[384,128], index: 2, kind: input, shape index: {}]
  %s3 = inlined_call_operand.hbm [shape: f32[16,128], index: 3, kind: output, shape index: {}]
  %s4 = sld [smem:[#allocation0]]
  $region34: #{tpu_custom_call.1} parent=0
    _
  %s6 = ssub.s32 1, %s4
  %s7 = scalar_select 0, %s6, %s4
  $region1: #{tpu_custom_call.1} parent=0
    #allocation2 [shape = 'u8[8192]{0}', space=vmem, size = 0x2000, scoped, tag = 'input window, operand 0, single buffered']
    #allocation3 [shape = 's32[1]{0}', space=sflag, size = 0x4, scoped, tag = 'scoped memory for tpu_custom_call.1']
    #allocation4 [shape = 's32[1]{0}', space=sflag, size = 0x4, scoped, tag = 'scoped memory for tpu_custom_call.1']
    #allocation5 [shape = 'u8[393216]{0}', space=vmem, size = 0x60000, scoped, tag = 'input window, operand 1, single buffered']
    #allocation6 [shape = 's32[1]{0}', space=sflag, size = 0x4, scoped, tag = 'scoped memory for tpu_custom_call.1']
    #allocation7 [shape = 'u8[196608]{0}', space=vmem, size = 0x30000, scoped, tag = 'input window, operand 2, single buffered']
    #allocation8 [shape = 'u8[8192]{0}', space=vmem, size = 0x2000, scoped, tag = 'output window, operand 0, single buffered']
    %8 = vsyncpa [#allocation3], 0
    %9 = vsyncpa [#allocation6], 0
    %10 = vsyncpa [#allocation4], 0
    // Predicated region
    $region2: #{tpu_custom_call.1} parent=1 // pred_check
      _
    $region3: #{tpu_custom_call.1} parent=1 // pred_check_branch
      %12 = sbr.rel (0) target = $region5
    $region4: #{tpu_custom_call.1} parent=1 // pred_region
      %14 = vsyncadd [#allocation3], 0
      %s15 = sshll.u32 %s0, 4
      %s16 = int_to_ptr.hbm [resolvable:$true] %s15
      %s17 = sshll.u32 [#allocation2], 4
      %s18 = int_to_ptr.vmem [resolvable:$true] %s17
      %23 = dma.hbm_to_vmem [thread:$0]  %s16, 256, %s18, [#allocation3], 128, 128, 8
    $region5: #{tpu_custom_call.1} parent=1 // pred_fallthru
      _
    // Predicated region
    $region6: #{tpu_custom_call.1} parent=1 // pred_check
      _
    $region7: #{tpu_custom_call.1} parent=1 // pred_check_branch
      %25 = sbr.rel (0) target = $region9
    $region8: #{tpu_custom_call.1} parent=1 // pred_region
      %27 = vsyncadd [#allocation6], 0
      %s28 = sshll.u32 %s1, 4
      %s29 = int_to_ptr.hbm [resolvable:$true] %s28
      %s30 = sshll.u32 [#allocation5], 4
      %s31 = int_to_ptr.vmem [resolvable:$true] %s30
      %36 = dma.hbm_to_vmem [thread:$0]  %s29, 12288, %s31, [#allocation6], 768, 768, 48
    $region9: #{tpu_custom_call.1} parent=1 // pred_fallthru
      _
    // Predicated region
    $region10: #{tpu_custom_call.1} parent=1 // pred_check
      _
    $region11: #{tpu_custom_call.1} parent=1 // pred_check_branch
      %38 = sbr.rel (0) target = $region13
    $region12: #{tpu_custom_call.1} parent=1 // pred_region
      %40 = vsyncadd [#allocation6], 0
      %s41 = sshll.u32 %s2, 4
      %s42 = int_to_ptr.hbm [resolvable:$true] %s41
      %s43 = sshll.u32 [#allocation7], 4
      %s44 = int_to_ptr.vmem [resolvable:$true] %s43
      %49 = dma.hbm_to_vmem [thread:$0]  %s42, 6144, %s44, [#allocation6], 128, 128, 8
    $region13: #{tpu_custom_call.1} parent=1 // pred_fallthru
      _
    // Predicated region
    $region14: #{tpu_custom_call.1} parent=1 // pred_check
      _
    $region15: #{tpu_custom_call.1} parent=1 // pred_check_branch
      %51 = sbr.rel (0) target = $region17
    $region16: #{tpu_custom_call.1} parent=1 // pred_region
      %53 = dma.done [#allocation3], 256
    $region17: #{tpu_custom_call.1} parent=1 // pred_fallthru
      _
    // Predicated region
    $region18: #{tpu_custom_call.1} parent=1 // pred_check
      _
    $region19: #{tpu_custom_call.1} parent=1 // pred_check_branch
      %55 = sbr.rel (0) target = $region21
    $region20: #{tpu_custom_call.1} parent=1 // pred_region
      %57 = dma.done [#allocation6], 12288
    $region21: #{tpu_custom_call.1} parent=1 // pred_fallthru
      _
    // Predicated region
    $region22: #{tpu_custom_call.1} parent=1 // pred_check
      _
    $region23: #{tpu_custom_call.1} parent=1 // pred_check_branch
      %59 = sbr.rel (0) target = $region25
    $region24: #{tpu_custom_call.1} parent=1 // pred_region
      %61 = dma.done [#allocation6], 6144
    $region25: #{tpu_custom_call.1} parent=1 // pred_fallthru
      _
    %v62 = vld [vmem:[#allocation2] sm:$0xff]
    %v63 = vld [vmem:[#allocation2 + $0x8] sm:$0xff]
    %v64 = vld [vmem:[#allocation5] sm:$0xff]
    %v65 = vld [vmem:[#allocation5 + $0x8] sm:$0xff]
    %v66 = vld [vmem:[#allocation5 + $0x30] sm:$0xff]
    %v67 = vld [vmem:[#allocation5 + $0x38] sm:$0xff]
    %v68 = vld [vmem:[#allocation5 + $0x60] sm:$0xff]
    %v69 = vld [vmem:[#allocation5 + $0x68] sm:$0xff]
    %v70 = vld [vmem:[#allocation5 + $0x90] sm:$0xff]
    %v71 = vld [vmem:[#allocation5 + $0x98] sm:$0xff]
    %v72 = vld [vmem:[#allocation5 + $0xc0] sm:$0xff]
    %v73 = vld [vmem:[#allocation5 + $0xc8] sm:$0xff]
    %v74 = vld [vmem:[#allocation5 + $0xf0] sm:$0xff]
    %v75 = vld [vmem:[#allocation5 + $0xf8] sm:$0xff]
    %v76 = vld [vmem:[#allocation5 + $0x120] sm:$0xff]
    %v77 = vld [vmem:[#allocation5 + $0x128] sm:$0xff]
    %v78 = vld [vmem:[#allocation5 + $0x150] sm:$0xff]
    %v79 = vld [vmem:[#allocation5 + $0x158] sm:$0xff]
    %v80 = vld [vmem:[#allocation5 + $0x180] sm:$0xff]
    %v81 = vld [vmem:[#allocation5 + $0x188] sm:$0xff]
    %v82 = vld [vmem:[#allocation5 + $0x1b0] sm:$0xff]
    %v83 = vld [vmem:[#allocation5 + $0x1b8] sm:$0xff]
    %v84 = vld [vmem:[#allocation5 + $0x1e0] sm:$0xff]
    %v85 = vld [vmem:[#allocation5 + $0x1e8] sm:$0xff]
    %v86 = vld [vmem:[#allocation5 + $0x210] sm:$0xff]
    %v87 = vld [vmem:[#allocation5 + $0x218] sm:$0xff]
    %v88 = vld [vmem:[#allocation5 + $0x240] sm:$0xff]
    %v89 = vld [vmem:[#allocation5 + $0x248] sm:$0xff]
    %v90 = vld [vmem:[#allocation5 + $0x270] sm:$0xff]
    %v91 = vld [vmem:[#allocation5 + $0x278] sm:$0xff]
    %v92 = vld [vmem:[#allocation5 + $0x2a0] sm:$0xff]
    %v93 = vld [vmem:[#allocation5 + $0x2a8] sm:$0xff]
    %v94 = vld [vmem:[#allocation5 + $0x2d0] sm:$0xff]
    %v95 = vld [vmem:[#allocation5 + $0x2d8] sm:$0xff]
    %96 = vmatpush.msra.mxu0 %v94
    %97 = vmatpush.msra.mxu0 %v92
    %98 = vmatpush.msra.mxu0 %v90
    %99 = vmatpush.msra.mxu0 %v88
    %100 = vmatpush.msra.mxu0 %v86
    %101 = vmatpush.msra.mxu0 %v84
    %102 = vmatpush.msra.mxu0 %v82
    %103 = vmatpush.msra.mxu0 %v80
    %104 = vmatpush.msra.mxu0 %v78
    %105 = vmatpush.msra.mxu0 %v76
    %106 = vmatpush.msra.mxu0 %v74
    %107 = vmatpush.msra.mxu0 %v72
    %108 = vmatpush.msra.mxu0 %v70
    %109 = vmatpush.msra.mxu0 %v68
    %110 = vmatpush.msra.mxu0 %v66
    %111 = vmatpush.msra.mxu0 %v64
    %112 = vmatmul.f32.gmra.mxu0 %v62
    %v113 = vpop.f32.mrf.mxu0
    %v114 = vadd.f32 0.0, %v113
    %115 = vmatmul.f32.gmra.mxu0 %v63
    %v116 = vpop.f32.mrf.mxu0
    %v117 = vadd.f32 0.0, %v116
    %118 = vdwg.mxu0
    %119 = vmatpush.msra.mxu0 %v95
    %120 = vmatpush.msra.mxu0 %v93
    %121 = vmatpush.msra.mxu0 %v91
    %122 = vmatpush.msra.mxu0 %v89
    %123 = vmatpush.msra.mxu0 %v87
    %124 = vmatpush.msra.mxu0 %v85
    %125 = vmatpush.msra.mxu0 %v83
    %126 = vmatpush.msra.mxu0 %v81
    %127 = vmatpush.msra.mxu0 %v79
    %128 = vmatpush.msra.mxu0 %v77
    %129 = vmatpush.msra.mxu0 %v75
    %130 = vmatpush.msra.mxu0 %v73
    %131 = vmatpush.msra.mxu0 %v71
    %132 = vmatpush.msra.mxu0 %v69
    %133 = vmatpush.msra.mxu0 %v67
    %134 = vmatpush.msra.mxu0 %v65
    %135 = vmatmul.f32.gmra.mxu0 %v62
    %v136 = vpop.f32.mrf.mxu0
    %v137 = vadd.f32 0.0, %v136
    %138 = vmatmul.f32.gmra.mxu0 %v63
    %v139 = vpop.f32.mrf.mxu0
    %v140 = vadd.f32 0.0, %v139
    %141 = vdwg.mxu0
    %v142 = vxor.u32 %v114, 2147483648
    %v143 = vxor.u32 %v117, 2147483648
    %v144 = vmul.f32 %v142, 1.442695
    %v145 = vpow.pop %v144
    %v146 = vmul.f32 %v143, 1.442695
    %v147 = vpow.pop %v146
    %v148 = vadd.f32 %v145, 1.0
    %v149 = vadd.f32 %v147, 1.0
    %v150 = vrcp.pop %v148
    %v151 = vmul.f32 %v148, %v150
    %v152 = vsub.f32 1.0, %v151
    %v153 = vmul.f32 %v150, %v152
    %v154 = vadd.f32 %v150, %v153
    %vm155 = vweird.f32 %v148
    %vm156 = vweird.f32 %v150
    %vm157 = vmor %vm155, %vm156
    %v158 = vsel %vm157, %v150, %v154
    %v159 = vand.u32 2147483647, %v148
    %vm160 = vcmp.eq.f32.partialorder %v159, 8.507059e+37
    %v161 = vand.u32 %v148, 2147483648
    %v162 = vor.u32 1.1754944e-38, %v161
    %v163 = vsel %vm160, %v162, %v158
    %v164 = vmul.f32 1.0, %v163
    %v165 = vrcp.pop %v149
    %v166 = vmul.f32 %v149, %v165
    %v167 = vsub.f32 1.0, %v166
    %v168 = vmul.f32 %v165, %v167
    %v169 = vadd.f32 %v165, %v168
    %vm170 = vweird.f32 %v149
    %vm171 = vweird.f32 %v165
    %vm172 = vmor %vm170, %vm171
    %v173 = vsel %vm172, %v165, %v169
    %v174 = vand.u32 2147483647, %v149
    %vm175 = vcmp.eq.f32.partialorder %v174, 8.507059e+37
    %v176 = vand.u32 %v149, 2147483648
    %v177 = vor.u32 1.1754944e-38, %v176
    %v178 = vsel %vm175, %v177, %v173
    %v179 = vmul.f32 1.0, %v178
    %v180 = vmul.f32 %v114, %v164
    %v181 = vmul.f32 %v117, %v179
    %v182 = vmul.f32 %v180, %v137
    %v183 = vmul.f32 %v181, %v140
    %v184 = vld [vmem:[#allocation7] sm:$0xff]
    %v185 = vld [vmem:[#allocation7 + $0x8] sm:$0xff]
    %v186 = vld [vmem:[#allocation7 + $0x10] sm:$0xff]
    %v187 = vld [vmem:[#allocation7 + $0x18] sm:$0xff]
    %v188 = vld [vmem:[#allocation7 + $0x20] sm:$0xff]
    %v189 = vld [vmem:[#allocation7 + $0x28] sm:$0xff]
    %v190 = vld [vmem:[#allocation7 + $0x30] sm:$0xff]
    %v191 = vld [vmem:[#allocation7 + $0x38] sm:$0xff]
    %v192 = vld [vmem:[#allocation7 + $0x40] sm:$0xff]
    %v193 = vld [vmem:[#allocation7 + $0x48] sm:$0xff]
    %v194 = vld [vmem:[#allocation7 + $0x50] sm:$0xff]
    %v195 = vld [vmem:[#allocation7 + $0x58] sm:$0xff]
    %v196 = vld [vmem:[#allocation7 + $0x60] sm:$0xff]
    %v197 = vld [vmem:[#allocation7 + $0x68] sm:$0xff]
    %v198 = vld [vmem:[#allocation7 + $0x70] sm:$0xff]
    %v199 = vld [vmem:[#allocation7 + $0x78] sm:$0xff]
    %v200 = vld [vmem:[#allocation5 + $0x10] sm:$0xff]
    %v201 = vld [vmem:[#allocation5 + $0x18] sm:$0xff]
    %v202 = vld [vmem:[#allocation5 + $0x40] sm:$0xff]
    %v203 = vld [vmem:[#allocation5 + $0x48] sm:$0xff]
    %v204 = vld [vmem:[#allocation5 + $0x70] sm:$0xff]
    %v205 = vld [vmem:[#allocation5 + $0x78] sm:$0xff]
    %v206 = vld [vmem:[#allocation5 + $0xa0] sm:$0xff]
    %v207 = vld [vmem:[#allocation5 + $0xa8] sm:$0xff]
    %v208 = vld [vmem:[#allocation5 + $0xd0] sm:$0xff]
    %v209 = vld [vmem:[#allocation5 + $0xd8] sm:$0xff]
    %v210 = vld [vmem:[#allocation5 + $0x100] sm:$0xff]
    %v211 = vld [vmem:[#allocation5 + $0x108] sm:$0xff]
    %v212 = vld [vmem:[#allocation5 + $0x130] sm:$0xff]
    %v213 = vld [vmem:[#allocation5 + $0x138] sm:$0xff]
    %v214 = vld [vmem:[#allocation5 + $0x160] sm:$0xff]
    %v215 = vld [vmem:[#allocation5 + $0x168] sm:$0xff]
    %v216 = vld [vmem:[#allocation5 + $0x190] sm:$0xff]
    %v217 = vld [vmem:[#allocation5 + $0x198] sm:$0xff]
    %v218 = vld [vmem:[#allocation5 + $0x1c0] sm:$0xff]
    %v219 = vld [vmem:[#allocation5 + $0x1c8] sm:$0xff]
    %v220 = vld [vmem:[#allocation5 + $0x1f0] sm:$0xff]
    %v221 = vld [vmem:[#allocation5 + $0x1f8] sm:$0xff]
    %v222 = vld [vmem:[#allocation5 + $0x220] sm:$0xff]
    %v223 = vld [vmem:[#allocation5 + $0x228] sm:$0xff]
    %v224 = vld [vmem:[#allocation5 + $0x250] sm:$0xff]
    %v225 = vld [vmem:[#allocation5 + $0x258] sm:$0xff]
    %v226 = vld [vmem:[#allocation5 + $0x280] sm:$0xff]
    %v227 = vld [vmem:[#allocation5 + $0x288] sm:$0xff]
    %v228 = vld [vmem:[#allocation5 + $0x2b0] sm:$0xff]
    %v229 = vld [vmem:[#allocation5 + $0x2b8] sm:$0xff]
    %v230 = vld [vmem:[#allocation5 + $0x2e0] sm:$0xff]
    %v231 = vld [vmem:[#allocation5 + $0x2e8] sm:$0xff]
    %232 = vmatpush.msra.mxu0 %v230
    %233 = vmatpush.msra.mxu0 %v228
    %234 = vmatpush.msra.mxu0 %v226
    %235 = vmatpush.msra.mxu0 %v224
    %236 = vmatpush.msra.mxu0 %v222
    %237 = vmatpush.msra.mxu0 %v220
    %238 = vmatpush.msra.mxu0 %v218
    %239 = vmatpush.msra.mxu0 %v216
    %240 = vmatpush.msra.mxu0 %v214
    %241 = vmatpush.msra.mxu0 %v212
    %242 = vmatpush.msra.mxu0 %v210
    %243 = vmatpush.msra.mxu0 %v208
    %244 = vmatpush.msra.mxu0 %v206
    %245 = vmatpush.msra.mxu0 %v204
    %246 = vmatpush.msra.mxu0 %v202
    %247 = vmatpush.msra.mxu0 %v200
    %248 = vmatmul.f32.gmra.mxu0 %v62
    %v249 = vpop.f32.mrf.mxu0
    %v250 = vadd.f32 0.0, %v249
    %251 = vmatmul.f32.gmra.mxu0 %v63
    %v252 = vpop.f32.mrf.mxu0
    %v253 = vadd.f32 0.0, %v252
    %254 = vdwg.mxu0
    %255 = vmatpush.msra.mxu0 %v231
    %256 = vmatpush.msra.mxu0 %v229
    %257 = vmatpush.msra.mxu0 %v227
    %258 = vmatpush.msra.mxu0 %v225
    %259 = vmatpush.msra.mxu0 %v223
    %260 = vmatpush.msra.mxu0 %v221
    %261 = vmatpush.msra.mxu0 %v219
    %262 = vmatpush.msra.mxu0 %v217
    %263 = vmatpush.msra.mxu0 %v215
    %264 = vmatpush.msra.mxu0 %v213
    %265 = vmatpush.msra.mxu0 %v211
    %266 = vmatpush.msra.mxu0 %v209
    %267 = vmatpush.msra.mxu0 %v207
    %268 = vmatpush.msra.mxu0 %v205
    %269 = vmatpush.msra.mxu0 %v203
    %270 = vmatpush.msra.mxu0 %v201
    %271 = vmatmul.f32.gmra.mxu0 %v62
    %v272 = vpop.f32.mrf.mxu0
    %v273 = vadd.f32 0.0, %v272
    %274 = vmatmul.f32.gmra.mxu0 %v63
    %v275 = vpop.f32.mrf.mxu0
    %v276 = vadd.f32 0.0, %v275
    %277 = vdwg.mxu0
    %v278 = vxor.u32 %v250, 2147483648
    %v279 = vxor.u32 %v253, 2147483648
    %v280 = vmul.f32 %v278, 1.442695
    %v281 = vpow.pop %v280
    %v282 = vmul.f32 %v279, 1.442695
    %v283 = vpow.pop %v282
    %v284 = vadd.f32 %v281, 1.0
    %v285 = vadd.f32 %v283, 1.0
    %v286 = vrcp.pop %v284
    %v287 = vmul.f32 %v284, %v286
    %v288 = vsub.f32 1.0, %v287
    %v289 = vmul.f32 %v286, %v288
    %v290 = vadd.f32 %v286, %v289
    %vm291 = vweird.f32 %v284
    %vm292 = vweird.f32 %v286
    %vm293 = vmor %vm291, %vm292
    %v294 = vsel %vm293, %v286, %v290
    %v295 = vand.u32 2147483647, %v284
    %vm296 = vcmp.eq.f32.partialorder %v295, 8.507059e+37
    %v297 = vand.u32 %v284, 2147483648
    %v298 = vor.u32 1.1754944e-38, %v297
    %v299 = vsel %vm296, %v298, %v294
    %v300 = vmul.f32 1.0, %v299
    %v301 = vrcp.pop %v285
    %v302 = vmul.f32 %v285, %v301
    %v303 = vsub.f32 1.0, %v302
    %v304 = vmul.f32 %v301, %v303
    %v305 = vadd.f32 %v301, %v304
    %vm306 = vweird.f32 %v285
    %vm307 = vweird.f32 %v301
    %vm308 = vmor %vm306, %vm307
    %v309 = vsel %vm308, %v301, %v305
    %v310 = vand.u32 2147483647, %v285
    %vm311 = vcmp.eq.f32.partialorder %v310, 8.507059e+37
    %v312 = vand.u32 %v285, 2147483648
    %v313 = vor.u32 1.1754944e-38, %v312
    %v314 = vsel %vm311, %v313, %v309
    %v315 = vmul.f32 1.0, %v314
    %v316 = vmul.f32 %v250, %v300
    %v317 = vmul.f32 %v253, %v315
    %v318 = vmul.f32 %v316, %v273
    %v319 = vmul.f32 %v317, %v276
    %v320 = vld [vmem:[#allocation7 + $0x80] sm:$0xff]
    %v321 = vld [vmem:[#allocation7 + $0x88] sm:$0xff]
    %v322 = vld [vmem:[#allocation7 + $0x90] sm:$0xff]
    %v323 = vld [vmem:[#allocation7 + $0x98] sm:$0xff]
    %v324 = vld [vmem:[#allocation7 + $0xa0] sm:$0xff]
    %v325 = vld [vmem:[#allocation7 + $0xa8] sm:$0xff]
    %v326 = vld [vmem:[#allocation7 + $0xb0] sm:$0xff]
    %v327 = vld [vmem:[#allocation7 + $0xb8] sm:$0xff]
    %v328 = vld [vmem:[#allocation7 + $0xc0] sm:$0xff]
    %v329 = vld [vmem:[#allocation7 + $0xc8] sm:$0xff]
    %v330 = vld [vmem:[#allocation7 + $0xd0] sm:$0xff]
    %v331 = vld [vmem:[#allocation7 + $0xd8] sm:$0xff]
    %v332 = vld [vmem:[#allocation7 + $0xe0] sm:$0xff]
    %v333 = vld [vmem:[#allocation7 + $0xe8] sm:$0xff]
    %v334 = vld [vmem:[#allocation7 + $0xf0] sm:$0xff]
    %v335 = vld [vmem:[#allocation7 + $0xf8] sm:$0xff]
    %336 = vmatpush.msra.mxu0 %v335
    %337 = vmatpush.msra.mxu0 %v334
    %338 = vmatpush.msra.mxu0 %v333
    %339 = vmatpush.msra.mxu0 %v332
    %340 = vmatpush.msra.mxu0 %v331
    %341 = vmatpush.msra.mxu0 %v330
    %342 = vmatpush.msra.mxu0 %v329
    %343 = vmatpush.msra.mxu0 %v328
    %344 = vmatpush.msra.mxu0 %v327
    %345 = vmatpush.msra.mxu0 %v326
    %346 = vmatpush.msra.mxu0 %v325
    %347 = vmatpush.msra.mxu0 %v324
    %348 = vmatpush.msra.mxu0 %v323
    %349 = vmatpush.msra.mxu0 %v322
    %350 = vmatpush.msra.mxu0 %v321
    %351 = vmatpush.msra.mxu0 %v320
    %352 = vmatmul.f32.gmra.mxu0 %v318
    %v353 = vpop.f32.mrf.mxu0
    %v354 = vadd.f32 0.0, %v353
    %355 = vmatmul.f32.gmra.mxu0 %v319
    %v356 = vpop.f32.mrf.mxu0
    %v357 = vadd.f32 0.0, %v356
    %358 = vdwg.mxu0
    %359 = vmatpush.msra.mxu0 %v199
    %360 = vmatpush.msra.mxu0 %v198
    %361 = vmatpush.msra.mxu0 %v197
    %362 = vmatpush.msra.mxu0 %v196
    %363 = vmatpush.msra.mxu0 %v195
    %364 = vmatpush.msra.mxu0 %v194
    %365 = vmatpush.msra.mxu0 %v193
    %366 = vmatpush.msra.mxu0 %v192
    %367 = vmatpush.msra.mxu0 %v191
    %368 = vmatpush.msra.mxu0 %v190
    %369 = vmatpush.msra.mxu0 %v189
    %370 = vmatpush.msra.mxu0 %v188
    %371 = vmatpush.msra.mxu0 %v187
    %372 = vmatpush.msra.mxu0 %v186
    %373 = vmatpush.msra.mxu0 %v185
    %374 = vmatpush.msra.mxu0 %v184
    %375 = vmatmul.f32.gmra.mxu0 %v182
    %v376 = vpop.f32.mrf.mxu0
    %v377 = vadd.f32 %v354, %v376
    %378 = vmatmul.f32.gmra.mxu0 %v183
    %v379 = vpop.f32.mrf.mxu0
    %v380 = vadd.f32 %v357, %v379
    %381 = vdwg.mxu0
    %v382 = vld [vmem:[#allocation5 + $0x20] sm:$0xff]
    %v383 = vld [vmem:[#allocation5 + $0x28] sm:$0xff]
    %v384 = vld [vmem:[#allocation5 + $0x50] sm:$0xff]
    %v385 = vld [vmem:[#allocation5 + $0x58] sm:$0xff]
    %v386 = vld [vmem:[#allocation5 + $0x80] sm:$0xff]
    %v387 = vld [vmem:[#allocation5 + $0x88] sm:$0xff]
    %v388 = vld [vmem:[#allocation5 + $0xb0] sm:$0xff]
    %v389 = vld [vmem:[#allocation5 + $0xb8] sm:$0xff]
    %v390 = vld [vmem:[#allocation5 + $0xe0] sm:$0xff]
    %v391 = vld [vmem:[#allocation5 + $0xe8] sm:$0xff]
    %v392 = vld [vmem:[#allocation5 + $0x110] sm:$0xff]
    %v393 = vld [vmem:[#allocation5 + $0x118] sm:$0xff]
    %v394 = vld [vmem:[#allocation5 + $0x140] sm:$0xff]
    %v395 = vld [vmem:[#allocation5 + $0x148] sm:$0xff]
    %v396 = vld [vmem:[#allocation5 + $0x170] sm:$0xff]
    %v397 = vld [vmem:[#allocation5 + $0x178] sm:$0xff]
    %v398 = vld [vmem:[#allocation5 + $0x1a0] sm:$0xff]
    %v399 = vld [vmem:[#allocation5 + $0x1a8] sm:$0xff]
    %v400 = vld [vmem:[#allocation5 + $0x1d0] sm:$0xff]
    %v401 = vld [vmem:[#allocation5 + $0x1d8] sm:$0xff]
    %v402 = vld [vmem:[#allocation5 + $0x200] sm:$0xff]
    %v403 = vld [vmem:[#allocation5 + $0x208] sm:$0xff]
    %v404 = vld [vmem:[#allocation5 + $0x230] sm:$0xff]
    %v405 = vld [vmem:[#allocation5 + $0x238] sm:$0xff]
    %v406 = vld [vmem:[#allocation5 + $0x260] sm:$0xff]
    %v407 = vld [vmem:[#allocation5 + $0x268] sm:$0xff]
    %v408 = vld [vmem:[#allocation5 + $0x290] sm:$0xff]
    %v409 = vld [vmem:[#allocation5 + $0x298] sm:$0xff]
    %v410 = vld [vmem:[#allocation5 + $0x2c0] sm:$0xff]
    %v411 = vld [vmem:[#allocation5 + $0x2c8] sm:$0xff]
    %v412 = vld [vmem:[#allocation5 + $0x2f0] sm:$0xff]
    %v413 = vld [vmem:[#allocation5 + $0x2f8] sm:$0xff]
    %414 = vmatpush.msra.mxu0 %v412
    %415 = vmatpush.msra.mxu0 %v410
    %416 = vmatpush.msra.mxu0 %v408
    %417 = vmatpush.msra.mxu0 %v406
    %418 = vmatpush.msra.mxu0 %v404
    %419 = vmatpush.msra.mxu0 %v402
    %420 = vmatpush.msra.mxu0 %v400
    %421 = vmatpush.msra.mxu0 %v398
    %422 = vmatpush.msra.mxu0 %v396
    %423 = vmatpush.msra.mxu0 %v394
    %424 = vmatpush.msra.mxu0 %v392
    %425 = vmatpush.msra.mxu0 %v390
    %426 = vmatpush.msra.mxu0 %v388
    %427 = vmatpush.msra.mxu0 %v386
    %428 = vmatpush.msra.mxu0 %v384
    %429 = vmatpush.msra.mxu0 %v382
    %430 = vmatmul.f32.gmra.mxu0 %v62
    %v431 = vpop.f32.mrf.mxu0
    %v432 = vadd.f32 0.0, %v431
    %433 = vmatmul.f32.gmra.mxu0 %v63
    %v434 = vpop.f32.mrf.mxu0
    %v435 = vadd.f32 0.0, %v434
    %436 = vdwg.mxu0
    %437 = vmatpush.msra.mxu0 %v413
    %438 = vmatpush.msra.mxu0 %v411
    %439 = vmatpush.msra.mxu0 %v409
    %440 = vmatpush.msra.mxu0 %v407
    %441 = vmatpush.msra.mxu0 %v405
    %442 = vmatpush.msra.mxu0 %v403
    %443 = vmatpush.msra.mxu0 %v401
    %444 = vmatpush.msra.mxu0 %v399
    %445 = vmatpush.msra.mxu0 %v397
    %446 = vmatpush.msra.mxu0 %v395
    %447 = vmatpush.msra.mxu0 %v393
    %448 = vmatpush.msra.mxu0 %v391
    %449 = vmatpush.msra.mxu0 %v389
    %450 = vmatpush.msra.mxu0 %v387
    %451 = vmatpush.msra.mxu0 %v385
    %452 = vmatpush.msra.mxu0 %v383
    %453 = vmatmul.f32.gmra.mxu0 %v62
    %v454 = vpop.f32.mrf.mxu0
    %v455 = vadd.f32 0.0, %v454
    %456 = vmatmul.f32.gmra.mxu0 %v63
    %v457 = vpop.f32.mrf.mxu0
    %v458 = vadd.f32 0.0, %v457
    %459 = vdwg.mxu0
    %v460 = vxor.u32 %v432, 2147483648
    %v461 = vxor.u32 %v435, 2147483648
    %v462 = vmul.f32 %v460, 1.442695
    %v463 = vpow.pop %v462
    %v464 = vmul.f32 %v461, 1.442695
    %v465 = vpow.pop %v464
    %v466 = vadd.f32 %v463, 1.0
    %v467 = vadd.f32 %v465, 1.0
    %v468 = vrcp.pop %v466
    %v469 = vmul.f32 %v466, %v468
    %v470 = vsub.f32 1.0, %v469
    %v471 = vmul.f32 %v468, %v470
    %v472 = vadd.f32 %v468, %v471
    %vm473 = vweird.f32 %v466
    %vm474 = vweird.f32 %v468
    %vm475 = vmor %vm473, %vm474
    %v476 = vsel %vm475, %v468, %v472
    %v477 = vand.u32 2147483647, %v466
    %vm478 = vcmp.eq.f32.partialorder %v477, 8.507059e+37
    %v479 = vand.u32 %v466, 2147483648
    %v480 = vor.u32 1.1754944e-38, %v479
    %v481 = vsel %vm478, %v480, %v476
    %v482 = vmul.f32 1.0, %v481
    %v483 = vrcp.pop %v467
    %v484 = vmul.f32 %v467, %v483
    %v485 = vsub.f32 1.0, %v484
    %v486 = vmul.f32 %v483, %v485
    %v487 = vadd.f32 %v483, %v486
    %vm488 = vweird.f32 %v467
    %vm489 = vweird.f32 %v483
    %vm490 = vmor %vm488, %vm489
    %v491 = vsel %vm490, %v483, %v487
    %v492 = vand.u32 2147483647, %v467
    %vm493 = vcmp.eq.f32.partialorder %v492, 8.507059e+37
    %v494 = vand.u32 %v467, 2147483648
    %v495 = vor.u32 1.1754944e-38, %v494
    %v496 = vsel %vm493, %v495, %v491
    %v497 = vmul.f32 1.0, %v496
    %v498 = vmul.f32 %v432, %v482
    %v499 = vmul.f32 %v435, %v497
    %v500 = vmul.f32 %v498, %v455
    %v501 = vmul.f32 %v499, %v458
    %v502 = vld [vmem:[#allocation7 + $0x100] sm:$0xff]
    %v503 = vld [vmem:[#allocation7 + $0x108] sm:$0xff]
    %v504 = vld [vmem:[#allocation7 + $0x110] sm:$0xff]
    %v505 = vld [vmem:[#allocation7 + $0x118] sm:$0xff]
    %v506 = vld [vmem:[#allocation7 + $0x120] sm:$0xff]
    %v507 = vld [vmem:[#allocation7 + $0x128] sm:$0xff]
    %v508 = vld [vmem:[#allocation7 + $0x130] sm:$0xff]
    %v509 = vld [vmem:[#allocation7 + $0x138] sm:$0xff]
    %v510 = vld [vmem:[#allocation7 + $0x140] sm:$0xff]
    %v511 = vld [vmem:[#allocation7 + $0x148] sm:$0xff]
    %v512 = vld [vmem:[#allocation7 + $0x150] sm:$0xff]
    %v513 = vld [vmem:[#allocation7 + $0x158] sm:$0xff]
    %v514 = vld [vmem:[#allocation7 + $0x160] sm:$0xff]
    %v515 = vld [vmem:[#allocation7 + $0x168] sm:$0xff]
    %v516 = vld [vmem:[#allocation7 + $0x170] sm:$0xff]
    %v517 = vld [vmem:[#allocation7 + $0x178] sm:$0xff]
    %518 = vmatpush.msra.mxu0 %v517
    %519 = vmatpush.msra.mxu0 %v516
    %520 = vmatpush.msra.mxu0 %v515
    %521 = vmatpush.msra.mxu0 %v514
    %522 = vmatpush.msra.mxu0 %v513
    %523 = vmatpush.msra.mxu0 %v512
    %524 = vmatpush.msra.mxu0 %v511
    %525 = vmatpush.msra.mxu0 %v510
    %526 = vmatpush.msra.mxu0 %v509
    %527 = vmatpush.msra.mxu0 %v508
    %528 = vmatpush.msra.mxu0 %v507
    %529 = vmatpush.msra.mxu0 %v506
    %530 = vmatpush.msra.mxu0 %v505
    %531 = vmatpush.msra.mxu0 %v504
    %532 = vmatpush.msra.mxu0 %v503
    %533 = vmatpush.msra.mxu0 %v502
    %534 = vmatmul.f32.gmra.mxu0 %v500
    %v535 = vpop.f32.mrf.mxu0
    %v536 = vadd.f32 0.0, %v535
    %537 = vmatmul.f32.gmra.mxu0 %v501
    %v538 = vpop.f32.mrf.mxu0
    %v539 = vadd.f32 0.0, %v538
    %540 = vdwg.mxu0
    %v541 = vadd.f32 %v377, %v536
    %v542 = vadd.f32 %v380, %v539
    %543 = vst [vmem:[#allocation8] sm:$0xff] %v541
    %544 = vst [vmem:[#allocation8 + $0x8] sm:$0xff] %v542
    // Predicated region
    $region26: #{tpu_custom_call.1} parent=1 // pred_check
      _
    $region27: #{tpu_custom_call.1} parent=1 // pred_check_branch
      %546 = sbr.rel (0) target = $region29
    $region28: #{tpu_custom_call.1} parent=1 // pred_region
      %548 = vsyncadd [#allocation4], 0
      %s549 = sshll.u32 [#allocation8], 4
      %s550 = int_to_ptr.vmem [resolvable:$true] %s549
      %s551 = sshll.u32 %s3, 4
      %s552 = int_to_ptr.hbm [resolvable:$true] %s551
      %557 = dma.vmem_to_hbm [thread:$0]  %s550, 256, %s552, [#allocation4], 128, 128, 8
    $region29: #{tpu_custom_call.1} parent=1 // pred_fallthru
      _
    // Predicated region
    $region30: #{tpu_custom_call.1} parent=1 // pred_check
      _
    $region31: #{tpu_custom_call.1} parent=1 // pred_check_branch
      %559 = sbr.rel (0) target = $region33
    $region32: #{tpu_custom_call.1} parent=1 // pred_region
      %561 = dma.done [#allocation4], 256
    $region33: #{tpu_custom_call.1} parent=1 // pred_fallthru
      _
    %562 = vsyncpa [#allocation3], 1
    %563 = vsyncpa [#allocation6], 1
    %564 = vsyncpa [#allocation4], 1

</llo_original>
